<compile_context>
chip_gen: v6e
topology: v6e:2x2x1
jax: 0.10.0
libtpu: 0.0.40
codegen_flags: <defaults>
</compile_context>

<pallas_src>
import functools

import jax
import jax.numpy as jnp
from jax.experimental import pallas as pl
from jax.experimental.pallas import tpu as pltpu


def _round_up(x: int, m: int) -> int:
    return (x + m - 1) // m * m


def _residual_kernel(x_ref, w_ref, b_ref, *rest, eps: float, use_dropout: bool):
    if use_dropout:
        mask_ref, o_ref = rest
    else:
        (o_ref,) = rest

    x = x_ref[...].astype(jnp.float32)                         # (tm, D)

    # ---- LayerNorm statistics in f32 (gamma/beta already folded into w/b) ----
    mean = jnp.mean(x, axis=-1, keepdims=True)
    centered = x - mean
    var = jnp.mean(centered * centered, axis=-1, keepdims=True)
    x_hat = centered * jax.lax.rsqrt(var + eps)                 # (tm, D)

    # ---- sub-layer: dense D -> D on the MXU (bf16 in, f32 accumulate) -------
    y = jnp.dot(x_hat.astype(jnp.bfloat16), w_ref[...],
                preferred_element_type=jnp.float32)
    y = y + b_ref[...]                                          # (tm, D)

    # ---- residual add (spec applies dropout AFTER the add) ------------------
    y = y + x

    # ---- dropout: pre-scaled inverted-dropout mask streamed from HBM --------
    if use_dropout:
        y = y * mask_ref[...]

    o_ref[...] = y.astype(o_ref.dtype)


def residual_connection(x, w, b, gamma, beta, key, *,
                        eps: float = 1e-5,
                        dropout_p: float = 0.1,
                        training: bool = True,
                        tile_rows: int = 256):
    """out = Dropout(Dense(LayerNorm(x)) + x).   x: (B, S, D) float32."""
    B, S, D = x.shape
    N = B * S

    # Fold the LayerNorm affine into the dense projection (host-side, once):
    #   (x_hat*gamma + beta) @ W + b == x_hat @ (diag(gamma) @ W) + (beta @ W + b)
    gamma = gamma.reshape(D)
    beta = beta.reshape(D)
    w_folded = (gamma[:, None] * w).astype(jnp.bfloat16)        # (D, D) bf16
    b_folded = (b.reshape(1, D) + beta.reshape(1, D) @ w).astype(jnp.float32)

    # Row tiling: big tiles amortize per-grid-step overhead and fill MXU rows.
    tm = min(tile_rows, _round_up(N, 8))
    tm = _round_up(tm, 8)
    Np = _round_up(N, tm)

    x2 = x.reshape(N, D)
    if Np != N:
        x2 = jnp.pad(x2, ((0, Np - N), (0, 0)))

    use_dropout = bool(training) and float(dropout_p) > 0.0

    inputs = [x2, w_folded, b_folded]
    in_specs = [
        pl.BlockSpec((tm, D), lambda i: (i, 0)),     # activation rows
        pl.BlockSpec((D, D), lambda i: (0, 0)),      # folded weight (resident)
        pl.BlockSpec((1, D), lambda i: (0, 0)),      # folded bias
    ]
    if use_dropout:
        # TODO(synk): in-kernel pltpu.prng_seed/prng_random_bits has no
        # interpret-mode lowering, so the dropout mask is generated host-side.
        keep = jax.random.bernoulli(key, 1.0 - dropout_p, (Np, D))
        mask = keep.astype(jnp.float32) * (1.0 / (1.0 - dropout_p))
        inputs.append(mask)
        in_specs.append(pl.BlockSpec((tm, D), lambda i: (i, 0)))

    kernel = functools.partial(_residual_kernel, eps=eps, use_dropout=use_dropout)

    # VMEM budget: double-buffered row tiles (x, mask, out) + resident bf16
    # weight + bias, with a few MiB of headroom; capped well under 64 MiB
    # physical on v7x.
    n_streams = 3 if use_dropout else 2
    vmem_bytes = 2 * (n_streams * tm * D * 4 + D * D * 2 + D * 4) + (4 << 20)
    vmem_bytes = int(min(vmem_bytes, 100 << 20))

    out2 = pl.pallas_call(
        kernel,
        out_shape=jax.ShapeDtypeStruct((Np, D), x.dtype),
        grid_spec=pltpu.PrefetchScalarGridSpec(
            num_scalar_prefetch=0,
            grid=(Np // tm,),
            in_specs=in_specs,
            out_specs=pl.BlockSpec((tm, D), lambda i: (i, 0)),
        ),
        compiler_params=pltpu.CompilerParams(
            dimension_semantics=("parallel",),   # row tiles are independent
            vmem_limit_bytes=vmem_bytes),
    )(*inputs)

    if Np != N:
        out2 = out2[:N]
    return out2.reshape(B, S, D)


def _reference(x, w, b, gamma, beta, eps):
    """Pure-JAX reference (no dropout) for a correctness sanity check."""
    mean = jnp.mean(x, axis=-1, keepdims=True)
    var = jnp.mean((x - mean) ** 2, axis=-1, keepdims=True)
    xh = (x - mean) * jax.lax.rsqrt(var + eps) * gamma.reshape(1, 1, -1) \
         + beta.reshape(1, 1, -1)
    y = jnp.dot(xh, w) + b.reshape(1, 1, -1)
    return y + x


if __name__ == "__main__":
    B, S, D = 2, 8, 128            # D multiple of 128 -> lane-dense tiles
    dropout_val = 0.1

    root = jax.random.PRNGKey(0)
    kx, kw, kb, kdrop = jax.random.split(root, 4)

    x = jax.random.normal(kx, (B, S, D), dtype=jnp.float32)

    # Deterministic synthetic parameters:
    #   LayerNorm: gamma = ones, beta = zeros (PyTorch default init)
    #   sub-layer (dense D->D): small random weight + bias
    gamma = jnp.ones((D,), dtype=jnp.float32)
    beta = jnp.zeros((D,), dtype=jnp.float32)
    w = (jax.random.normal(kw, (D, D), dtype=jnp.float32) / jnp.sqrt(D))
    b = jax.random.normal(kb, (1, D), dtype=jnp.float32) * 0.01

    # Training-mode run (with dropout).
    out_train = residual_connection(x, w, b, gamma, beta, kdrop,
                                    eps=1e-5, dropout_p=dropout_val,
                                    training=True)
    out_train = jax.block_until_ready(out_train)
    assert out_train.shape == (B, S, D)
    assert bool(jnp.all(jnp.isfinite(out_train)))

    # Eval-mode run checked against a pure-JAX reference (loose tol for bf16 MXU).
    out_eval = residual_connection(x, w, b, gamma, beta, kdrop,
                                   eps=1e-5, dropout_p=dropout_val,
                                   training=False)
    out_eval = jax.block_until_ready(out_eval)
    ref = _reference(x, w, b, gamma, beta, 1e-5)
    max_err = float(jnp.max(jnp.abs(out_eval - ref)))
    assert max_err < 1e-1, f"kernel mismatch vs reference: max abs err {max_err}"

    print("KERNEL_OK")
</pallas_src>

<mosaic_0001>
module attributes {stable_mosaic.version = 11 : i64} {
  func.func @_residual_kernel(%arg0: i32, %arg1: memref<16x128xf32, #tpu.memory_space<vmem>>, %arg2: memref<128x128xbf16, #tpu.memory_space<vmem>>, %arg3: memref<1x128xf32, #tpu.memory_space<vmem>>, %arg4: memref<16x128xf32, #tpu.memory_space<vmem>>, %arg5: memref<16x128xf32, #tpu.memory_space<vmem>>) attributes {dimension_semantics = [#tpu.dimension_semantics<parallel>], iteration_bounds = array<i64: 1>, scalar_prefetch = 0 : i64, scratch_operands = 0 : i64, tpu.core_type = #tpu.core_type<tc>, window_params = [{transform_indices = @transform_0, window_bounds = array<i64: 16, 128>}, {pipeline_mode = #tpu.pipeline_mode<synchronous>, transform_indices = @transform_1, window_bounds = array<i64: 128, 128>}, {pipeline_mode = #tpu.pipeline_mode<synchronous>, transform_indices = @transform_2, window_bounds = array<i64: 1, 128>}, {transform_indices = @transform_3, window_bounds = array<i64: 16, 128>}, {transform_indices = @transform_4, window_bounds = array<i64: 16, 128>}]} {
    %c0 = arith.constant 0 : index
    %c0_0 = arith.constant 0 : index
    %0 = vector.load %arg1[%c0, %c0_0] : memref<16x128xf32, #tpu.memory_space<vmem>>, vector<16x128xf32>
    %cst = arith.constant dense<0.000000e+00> : vector<16xf32>
    %1 = vector.multi_reduction <add>, %0, %cst [1] : vector<16x128xf32> to vector<16xf32>
    %2 = vector.shape_cast %1 : vector<16xf32> to vector<16x1xf32>
    %cst_1 = arith.constant 1.280000e+02 : f32
    %3 = vector.broadcast %cst_1 : f32 to vector<16x1xf32>
    %4 = arith.divf %2, %3 : vector<16x1xf32>
    %5 = vector.broadcast %4 : vector<16x1xf32> to vector<16x128xf32>
    %6 = arith.subf %0, %5 : vector<16x128xf32>
    %7 = arith.mulf %6, %6 : vector<16x128xf32>
    %cst_2 = arith.constant dense<0.000000e+00> : vector<16xf32>
    %8 = vector.multi_reduction <add>, %7, %cst_2 [1] : vector<16x128xf32> to vector<16xf32>
    %9 = vector.shape_cast %8 : vector<16xf32> to vector<16x1xf32>
    %cst_3 = arith.constant 1.280000e+02 : f32
    %10 = vector.broadcast %cst_3 : f32 to vector<16x1xf32>
    %11 = arith.divf %9, %10 : vector<16x1xf32>
    %cst_4 = arith.constant 9.99999974E-6 : f32
    %12 = vector.broadcast %cst_4 : f32 to vector<16x1xf32>
    %13 = arith.addf %11, %12 : vector<16x1xf32>
    %14 = math.rsqrt %13 : vector<16x1xf32>
    %15 = vector.broadcast %14 : vector<16x1xf32> to vector<16x128xf32>
    %16 = arith.mulf %6, %15 : vector<16x128xf32>
    %17 = arith.truncf %16 : vector<16x128xf32> to vector<16x128xbf16>
    %c0_5 = arith.constant 0 : index
    %c0_6 = arith.constant 0 : index
    %18 = vector.load %arg2[%c0_5, %c0_6] : memref<128x128xbf16, #tpu.memory_space<vmem>>, vector<128x128xbf16>
    %cst_7 = arith.constant dense<0.000000e+00> : vector<16x128xf32>
    %19 = tpu.matmul %17, %18, %cst_7 {dimension_numbers = #tpu.dot_dimension_numbers<[1], [0], [0], [1], [0, 0, 1, 1], [], []>} : vector<16x128xbf16>, vector<128x128xbf16>, vector<16x128xf32> -> vector<16x128xf32>
    %c0_8 = arith.constant 0 : index
    %c0_9 = arith.constant 0 : index
    %20 = vector.load %arg3[%c0_8, %c0_9] : memref<1x128xf32, #tpu.memory_space<vmem>>, vector<1x128xf32>
    %21 = vector.broadcast %20 : vector<1x128xf32> to vector<16x128xf32>
    %22 = arith.addf %19, %21 : vector<16x128xf32>
    %23 = arith.addf %22, %0 : vector<16x128xf32>
    %c0_10 = arith.constant 0 : index
    %c0_11 = arith.constant 0 : index
    %24 = vector.load %arg4[%c0_10, %c0_11] : memref<16x128xf32, #tpu.memory_space<vmem>>, vector<16x128xf32>
    %25 = arith.mulf %23, %24 : vector<16x128xf32>
    %c0_12 = arith.constant 0 : index
    %c0_13 = arith.constant 0 : index
    %26 = vector.load %arg5[%c0_12, %c0_13] : memref<16x128xf32, #tpu.memory_space<vmem>>, vector<16x128xf32>
    tpu.vector_store %arg5[%c0_12, %c0_13], %25 {strides = array<i32>} : memref<16x128xf32, #tpu.memory_space<vmem>>, vector<16x128xf32>,
    return
  }
  func.func @transform_0(%arg0: i32) -> (i32, i32) {
    %c0_i32 = arith.constant 0 : i32
    %c0_i32_0 = arith.constant 0 : i32
    return %arg0, %c0_i32 : i32, i32
  }
  func.func @transform_1(%arg0: i32) -> (i32, i32) {
    %c0_i32 = arith.constant 0 : i32
    %c0_i32_0 = arith.constant 0 : i32
    %c0_i32_1 = arith.constant 0 : i32
    return %c0_i32, %c0_i32_0 : i32, i32
  }
  func.func @transform_2(%arg0: i32) -> (i32, i32) {
    %c0_i32 = arith.constant 0 : i32
    %c0_i32_0 = arith.constant 0 : i32
    %c0_i32_1 = arith.constant 0 : i32
    return %c0_i32, %c0_i32_0 : i32, i32
  }
  func.func @transform_3(%arg0: i32) -> (i32, i32) {
    %c0_i32 = arith.constant 0 : i32
    %c0_i32_0 = arith.constant 0 : i32
    return %arg0, %c0_i32 : i32, i32
  }
  func.func @transform_4(%arg0: i32) -> (i32, i32) {
    %c0_i32 = arith.constant 0 : i32
    %c0_i32_0 = arith.constant 0 : i32
    return %arg0, %c0_i32 : i32, i32
  }
}

</mosaic_0001>

<llo_original>
// kernel: tpu_custom_call.1
$region0: #{tpu_custom_call.1}
  #allocation0 [shape = 'u32[]', space=smem, size = 0x4, offset = 0x4, fixed_abs, tag = 'smem constant byte address 0x4 - core index']
  #allocation1 [shape = 'u32[144,128]{1,0:T(1,128)}', space=vmem, size = 0x12000, scoped, tag = 'internal scratch']
  %s0 = inlined_call_operand.hbm [shape: f32[16,128], index: 0, kind: input, shape index: {}]
  %s1 = inlined_call_operand.hbm [shape: bf16[128,128], index: 1, kind: input, shape index: {}]
  %s2 = inlined_call_operand.vmem [shape: f32[1,128], index: 2, kind: input, shape index: {}]
  %s3 = inlined_call_operand.hbm [shape: f32[16,128], index: 3, kind: input, shape index: {}]
  %s4 = inlined_call_operand.hbm [shape: f32[16,128], index: 4, kind: output, shape index: {}]
  %s5 = sld [smem:[#allocation0]]
  $region38: #{tpu_custom_call.1} parent=0
    _
  %s7 = ssub.s32 1, %s5
  %s8 = scalar_select 0, %s7, %s5
  $region1: #{tpu_custom_call.1} parent=0
    #allocation2 [shape = 'u8[8192]{0}', space=vmem, size = 0x2000, scoped, tag = 'input window, operand 0, single buffered']
    #allocation3 [shape = 's32[1]{0}', space=sflag, size = 0x4, scoped, tag = 'scoped memory for tpu_custom_call.1']
    #allocation4 [shape = 's32[1]{0}', space=sflag, size = 0x4, scoped, tag = 'scoped memory for tpu_custom_call.1']
    #allocation5 [shape = 'u8[32768]{0}', space=vmem, size = 0x8000, scoped, tag = 'input window, operand 1, single buffered']
    #allocation6 [shape = 's32[1]{0}', space=sflag, size = 0x4, scoped, tag = 'scoped memory for tpu_custom_call.1']
    #allocation7 [shape = 'u8[8192]{0}', space=vmem, size = 0x2000, scoped, tag = 'input window, operand 3, single buffered']
    #allocation8 [shape = 'u8[8192]{0}', space=vmem, size = 0x2000, scoped, tag = 'output window, operand 0, single buffered']
    %9 = vsyncpa [#allocation3], 0
    %10 = vsyncpa [#allocation6], 0
    %11 = vsyncpa [#allocation4], 0
    // Predicated region
    $region2: #{tpu_custom_call.1} parent=1 // pred_check
      _
    $region3: #{tpu_custom_call.1} parent=1 // pred_check_branch
      %13 = sbr.rel (0) target = $region5
    $region4: #{tpu_custom_call.1} parent=1 // pred_region
      %s15 = ssub.s32 256, 256
      %16 = vsyncadd [#allocation3], %s15
      %s17 = sshll.u32 [#allocation2], 4
      %s18 = int_to_ptr.vmem [resolvable:$true] %s17
      %23 = dma.hbm_to_vmem [thread:$0]  %s0, 256, %s18, [#allocation3], 128, 128, 8
    $region5: #{tpu_custom_call.1} parent=1 // pred_fallthru
      _
    // Predicated region
    $region6: #{tpu_custom_call.1} parent=1 // pred_check
      _
    $region7: #{tpu_custom_call.1} parent=1 // pred_check_branch
      %25 = sbr.rel (0) target = $region9
    $region8: #{tpu_custom_call.1} parent=1 // pred_region
      %s27 = ssub.s32 1024, 1024
      %28 = vsyncadd [#allocation6], %s27
      %s29 = sshll.u32 [#allocation5], 4
      %s30 = int_to_ptr.vmem [resolvable:$true] %s29
      %35 = dma.hbm_to_vmem [thread:$0]  %s1, 1024, %s30, [#allocation6], 64, 64, 4
    $region9: #{tpu_custom_call.1} parent=1 // pred_fallthru
      _
    // Predicated region
    $region10: #{tpu_custom_call.1} parent=1 // pred_check
      _
    $region11: #{tpu_custom_call.1} parent=1 // pred_check_branch
      %37 = sbr.rel (0) target = $region13
    $region12: #{tpu_custom_call.1} parent=1 // pred_region
      _
    $region13: #{tpu_custom_call.1} parent=1 // pred_fallthru
      _
    // Predicated region
    $region14: #{tpu_custom_call.1} parent=1 // pred_check
      _
    $region15: #{tpu_custom_call.1} parent=1 // pred_check_branch
      %39 = sbr.rel (0) target = $region17
    $region16: #{tpu_custom_call.1} parent=1 // pred_region
      %s41 = ssub.s32 256, 256
      %42 = vsyncadd [#allocation6], %s41
      %s43 = sshll.u32 [#allocation7], 4
      %s44 = int_to_ptr.vmem [resolvable:$true] %s43
      %49 = dma.hbm_to_vmem [thread:$0]  %s3, 256, %s44, [#allocation6], 128, 128, 8
    $region17: #{tpu_custom_call.1} parent=1 // pred_fallthru
      _
    // Predicated region
    $region18: #{tpu_custom_call.1} parent=1 // pred_check
      _
    $region19: #{tpu_custom_call.1} parent=1 // pred_check_branch
      %51 = sbr.rel (0) target = $region21
    $region20: #{tpu_custom_call.1} parent=1 // pred_region
      %52 = dma.done [#allocation3], 256
    $region21: #{tpu_custom_call.1} parent=1 // pred_fallthru
      _
    // Predicated region
    $region22: #{tpu_custom_call.1} parent=1 // pred_check
      _
    $region23: #{tpu_custom_call.1} parent=1 // pred_check_branch
      %54 = sbr.rel (0) target = $region25
    $region24: #{tpu_custom_call.1} parent=1 // pred_region
      %55 = dma.done [#allocation6], 1024
    $region25: #{tpu_custom_call.1} parent=1 // pred_fallthru
      _
    // Predicated region
    $region26: #{tpu_custom_call.1} parent=1 // pred_check
      _
    $region27: #{tpu_custom_call.1} parent=1 // pred_check_branch
      %57 = sbr.rel (0) target = $region29
    $region28: #{tpu_custom_call.1} parent=1 // pred_region
      %58 = dma.done [#allocation6], 256
    $region29: #{tpu_custom_call.1} parent=1 // pred_fallthru
      _
    %v60 = vld [vmem:[#allocation2] sm:$0xff]
    %v61 = vld [vmem:[#allocation2 + $0x8] sm:$0xff]
    %62 = vadd.xlane.f32.xlu0 %v60
    %v63 = vpop.xlane.xlu0 %62
    %64 = vadd.xlane.f32.xlu0 %v61
    %v65 = vpop.xlane.xlu0 %64
    %v66 = vrcp.pop 128.0
    %v67 = vmul.f32 %v63, %v66
    %v68 = vmul.f32 %v65, %v66
    %v69 = vsub.f32 %v60, %v67
    %v70 = vsub.f32 %v61, %v68
    %v71 = vmul.f32 %v69, %v69
    %v72 = vmul.f32 %v70, %v70
    %73 = vadd.xlane.f32.xlu0 %v71
    %v74 = vpop.xlane.xlu0 %73
    %75 = vadd.xlane.f32.xlu0 %v72
    %v76 = vpop.xlane.xlu0 %75
    %v77 = vmul.f32 %v74, %v66
    %v78 = vmul.f32 %v76, %v66
    %v79 = vadd.f32 %v77, 1e-05
    %v80 = vadd.f32 %v78, 1e-05
    %v81 = vrsqrt.pop %v79
    %v82 = vrsqrt.pop %v80
    %v83 = vmul.f32 %v69, %v81
    %v84 = vmul.f32 %v70, %v82
    %v85 = vpack.c.bf16 %v84, %v83
    %v86 = vld [vmem:[#allocation5] sm:$0xf]
    %v87 = vld [vmem:[#allocation5 + $0x4] sm:$0xf]
    %v88 = vld [vmem:[#allocation5 + $0x8] sm:$0xf]
    %v89 = vld [vmem:[#allocation5 + $0xc] sm:$0xf]
    %v90 = vld [vmem:[#allocation5 + $0x10] sm:$0xf]
    %v91 = vld [vmem:[#allocation5 + $0x14] sm:$0xf]
    %v92 = vld [vmem:[#allocation5 + $0x18] sm:$0xf]
    %v93 = vld [vmem:[#allocation5 + $0x1c] sm:$0xf]
    %v94 = vld [vmem:[#allocation5 + $0x20] sm:$0xf]
    %v95 = vld [vmem:[#allocation5 + $0x24] sm:$0xf]
    %v96 = vld [vmem:[#allocation5 + $0x28] sm:$0xf]
    %v97 = vld [vmem:[#allocation5 + $0x2c] sm:$0xf]
    %v98 = vld [vmem:[#allocation5 + $0x30] sm:$0xf]
    %v99 = vld [vmem:[#allocation5 + $0x34] sm:$0xf]
    %v100 = vld [vmem:[#allocation5 + $0x38] sm:$0xf]
    %v101 = vld [vmem:[#allocation5 + $0x3c] sm:$0xf]
    %v102 = vld [vmem:[%s2] sm:$0x1]
    %v104 = vlaneseq
    %v105 = vshrl.u32 %v104, 7
    %v106 = vsub.s32 0, %v105
    %v107 = vrot.slane %v102, %v106
    %v125 = vunpack.c.l.b16 %v86
    %v126 = vunpack.c.l.b16 %v87
    %v127 = vunpack.c.l.b16 %v88
    %v128 = vunpack.c.l.b16 %v89
    %v129 = vunpack.c.l.b16 %v90
    %v130 = vunpack.c.l.b16 %v91
    %v131 = vunpack.c.l.b16 %v92
    %v132 = vunpack.c.l.b16 %v93
    %v133 = vunpack.c.l.b16 %v94
    %v134 = vunpack.c.l.b16 %v95
    %v135 = vunpack.c.l.b16 %v96
    %v136 = vunpack.c.l.b16 %v97
    %v137 = vunpack.c.l.b16 %v98
    %v138 = vunpack.c.l.b16 %v99
    %v139 = vunpack.c.l.b16 %v100
    %v140 = vunpack.c.l.b16 %v101
    %v141 = vpack.c.b16 %v126, %v125
    %v142 = vpack.c.b16 %v128, %v127
    %v143 = vpack.c.b16 %v130, %v129
    %v144 = vpack.c.b16 %v132, %v131
    %v145 = vpack.c.b16 %v134, %v133
    %v146 = vpack.c.b16 %v136, %v135
    %v147 = vpack.c.b16 %v138, %v137
    %v148 = vpack.c.b16 %v140, %v139
    %157 = vmatprep.subr.bf16.mxu0 0
    %158 = vmatpush1.bf16.msra.mxu0 %v148
    %159 = vmatprep.subr.bf16.mxu0 0
    %160 = vmatpush1.bf16.msra.mxu0 %v147
    %161 = vmatprep.subr.bf16.mxu0 0
    %162 = vmatpush1.bf16.msra.mxu0 %v146
    %163 = vmatprep.subr.bf16.mxu0 0
    %164 = vmatpush1.bf16.msra.mxu0 %v145
    %165 = vmatprep.subr.bf16.mxu0 0
    %166 = vmatpush1.bf16.msra.mxu0 %v144
    %167 = vmatprep.subr.bf16.mxu0 0
    %168 = vmatpush1.bf16.msra.mxu0 %v143
    %169 = vmatprep.subr.bf16.mxu0 0
    %170 = vmatpush1.bf16.msra.mxu0 %v142
    %171 = vmatprep.subr.bf16.mxu0 0
    %172 = vmatpush1.bf16.msra.mxu0 %v141
    %173 = vmatprep.subr.bf16.mxu0 0
    %174 = vmatpush2.bf16.msra.mxu0 0
    %175 = vmatprep.subr.bf16.mxu0 0
    %176 = vmatpush2.bf16.msra.mxu0 0
    %177 = vmatprep.subr.bf16.mxu0 0
    %178 = vmatpush2.bf16.msra.mxu0 0
    %179 = vmatprep.subr.bf16.mxu0 0
    %180 = vmatpush2.bf16.msra.mxu0 0
    %181 = vmatprep.subr.bf16.mxu0 0
    %182 = vmatpush2.bf16.msra.mxu0 0
    %183 = vmatprep.subr.bf16.mxu0 0
    %184 = vmatpush2.bf16.msra.mxu0 0
    %185 = vmatprep.subr.bf16.mxu0 0
    %186 = vmatpush2.bf16.msra.mxu0 0
    %187 = vmatprep.subr.bf16.mxu0 0
    %188 = vmatpush2.bf16.msra.mxu0 0
    %189 = vmatprep.mubr.bf16.mxu0 0
    %190 = vmatmul.mubr.bf16.gmra.mxu0 %v85
    %v191 = vpop.f32.mrf.mxu0
    %v192 = vadd.f32 %v107, %v191
    %v193 = vpop.f32.mrf.mxu0
    %v194 = vpop.f32.mrf.mxu0
    %v195 = vadd.f32 %v107, %v194
    %v196 = vpop.f32.mrf.mxu0
    %197 = vdwg.mxu0
    %v198 = vadd.f32 %v192, %v60
    %v199 = vadd.f32 %v195, %v61
    %v200 = vld [vmem:[#allocation7] sm:$0xff]
    %v201 = vld [vmem:[#allocation7 + $0x8] sm:$0xff]
    %v202 = vmul.f32 %v198, %v200
    %v203 = vmul.f32 %v199, %v201
    %204 = vst [vmem:[#allocation8] sm:$0xff] %v202
    %205 = vst [vmem:[#allocation8 + $0x8] sm:$0xff] %v203
    // Predicated region
    $region30: #{tpu_custom_call.1} parent=1 // pred_check
      _
    $region31: #{tpu_custom_call.1} parent=1 // pred_check_branch
      %207 = sbr.rel (0) target = $region33
    $region32: #{tpu_custom_call.1} parent=1 // pred_region
      %s209 = ssub.s32 256, 256
      %210 = vsyncadd [#allocation4], %s209
      %s211 = sshll.u32 [#allocation8], 4
      %s212 = int_to_ptr.vmem [resolvable:$true] %s211
      %217 = dma.vmem_to_hbm [thread:$0]  %s212, 256, %s4, [#allocation4], 128, 128, 8
    $region33: #{tpu_custom_call.1} parent=1 // pred_fallthru
      _
    // Predicated region
    $region34: #{tpu_custom_call.1} parent=1 // pred_check
      _
    $region35: #{tpu_custom_call.1} parent=1 // pred_check_branch
      %219 = sbr.rel (0) target = $region37
    $region36: #{tpu_custom_call.1} parent=1 // pred_region
      %220 = dma.done [#allocation4], 256
    $region37: #{tpu_custom_call.1} parent=1 // pred_fallthru
      _
    %221 = vsyncpa [#allocation3], 1
    %222 = vsyncpa [#allocation6], 1
    %223 = vsyncpa [#allocation4], 1

</llo_original>
